<compile_context>
chip_gen: v5e
topology: v5e:2x2
jax: 0.10.0
libtpu: 0.0.40
codegen_flags: <defaults>
</compile_context>

<pallas_src>
import numpy as np
import jax
import jax.numpy as jnp
from jax.experimental import pallas as pl
from jax.experimental.pallas import tpu as pltpu

_LANE = 128      # lane width: hidden/output feature dims padded to this
_SUBLANE = 8     # sublane width: batch / first-layer input padded to this


def _round_up(x, m):
    return ((x + m - 1) // m) * m


def _leaky_relu(x, slope=0.2):
    return jnp.where(x >= 0, x, slope * x)


def made_kernel(x_ref,
                w1_ref, b1_ref,
                w2_ref, b2_ref,
                w3_ref, b3_ref,
                o_ref):
    """Whole masked-MLP hot path: 3 (pre-masked) matmuls + biases + LeakyReLU.

    Weights/activations feed the MXU in their storage dtype (bf16 by default);
    accumulation, bias add and LeakyReLU(0.2) stay in float32.
    """
    cdt = w1_ref.dtype
    x = x_ref[...]                                   # already in compute dtype
    # layer 1: masked linear + LeakyReLU(0.2)   (mask pre-fused into w1)
    h = jnp.dot(x, w1_ref[...], preferred_element_type=jnp.float32) + b1_ref[...]
    h = _leaky_relu(h)
    # layer 2: masked linear + LeakyReLU(0.2)
    h = jnp.dot(h.astype(cdt), w2_ref[...],
                preferred_element_type=jnp.float32) + b2_ref[...]
    h = _leaky_relu(h)
    # layer 3 (output): masked linear, no activation
    out = jnp.dot(h.astype(cdt), w3_ref[...],
                  preferred_element_type=jnp.float32) + b3_ref[...]
    o_ref[...] = out.astype(o_ref.dtype)


def prepare_made_params(params, compute_dtype=jnp.bfloat16):
    """Fuse masks into weights, cast weights to the MXU compute dtype and pad.

    params: 3 tuples of (W[in,out], M[in,out], b[1,out]) float32.
    Returns 3 tuples of (W_masked_padded[in_p,out_p], b_padded[1,out_p]).

    Padding (all zeros, so real outputs are exact):
      * first layer's input dim -> multiple of 8 only (it equals the full array
        dim of the x block, so the (8,128) BlockSpec rule is satisfied) —
        avoids the 16x DMA/MXU blow-up of 128-padding a tiny in_features.
      * hidden + output dims -> multiple of 128 so stores stay lane-dense.
    Biases stay float32 (post-matmul elementwise math is f32 everywhere).
    """
    fused = []
    for layer, (w, m, b) in enumerate(params):
        wm = (w * m).astype(compute_dtype)            # fuse mask once, offline
        fin, fout = wm.shape
        fin_p = _round_up(fin, _SUBLANE if layer == 0 else _LANE)
        fout_p = _round_up(fout, _LANE)
        wm_p = jnp.zeros((fin_p, fout_p), compute_dtype).at[:fin, :fout].set(wm)
        b_p = jnp.zeros((1, fout_p), jnp.float32).at[:, :fout].set(
            b.reshape(1, fout).astype(jnp.float32))
        fused.append((wm_p, b_p))
    return fused


def _choose_tb(batch):
    """Batch tile: minimal 8-aligned tile for small batches (no wasted padded
    rows, single grid step); 256-512 for large batches to amortize the ~0.35us
    per-grid-step overhead and feed the 256-wide MXU, while keeping >=2 tiles
    so v7x's two TensorCores both get work under 'parallel' semantics."""
    b8 = _round_up(batch, _SUBLANE)
    if b8 <= 512:
        return b8
    return 256 if b8 <= 2048 else 512


def made_forward(x, fused_params, *, out_features, tb=None):
    """x: (B, in_features) f32.  fused_params: output of prepare_made_params."""
    B, F = x.shape
    (w1, b1), (w2, b2), (w3, b3) = fused_params
    Fp, H1p = w1.shape
    H2p = w2.shape[1]
    Op = w3.shape[1]
    assert w2.shape[0] == H1p and w3.shape[0] == H2p
    assert F <= Fp and out_features <= Op
    cdt = w1.dtype
    c_item = jnp.dtype(cdt).itemsize

    if tb is None:
        tb = _choose_tb(B)
    Bp = _round_up(B, tb)
    # Pad batch/in-features and cast to the compute dtype (halves x DMA in bf16).
    xp = jnp.zeros((Bp, Fp), cdt).at[:B, :F].set(x.astype(cdt))

    grid = (Bp // tb,)

    # VMEM budget: resident weights + biases, double-buffered x/out stream
    # tiles, f32 intermediates; generous margin, capped at v7x's 64 MiB per TC.
    weight_bytes = (Fp * H1p + H1p * H2p + H2p * Op) * c_item
    bias_bytes = (H1p + H2p + Op) * 4
    stream_bytes = 2 * tb * Fp * c_item + 2 * tb * Op * 4
    interm_bytes = tb * (H1p + H2p + Op) * (4 + c_item)
    vmem_limit = int(min(max(2 * (weight_bytes + bias_bytes + stream_bytes
                                  + interm_bytes) + (4 << 20), 32 << 20),
                         64 << 20))
    # TODO(synk): when the resident weights alone exceed the VMEM budget
    # (~2K-wide hidden in bf16 on v7x), switch to a K/N-tiled grid with an f32
    # accumulator + pl.when init/finalize instead of whole-layer residency.

    flops = 2 * Bp * (Fp * H1p + H1p * H2p + H2p * Op)
    bytes_accessed = Bp * Fp * c_item + weight_bytes + bias_bytes + Bp * Op * 4
    cost = pl.CostEstimate(flops=flops, transcendentals=0,
                           bytes_accessed=bytes_accessed)

    def run(single_buffer_weights):
        # Weight/bias blocks: constant index map -> fetched once; Buffered(1)
        # additionally drops their second (useless) pipeline buffer.
        wb_kwargs = ({"pipeline_mode": pl.Buffered(1)}
                     if single_buffer_weights else {})

        def const2d(shape):
            return pl.BlockSpec(shape, lambda i: (0, 0), **wb_kwargs)

        return pl.pallas_call(
            made_kernel,
            out_shape=jax.ShapeDtypeStruct((Bp, Op), jnp.float32),
            grid=grid,
            in_specs=[
                pl.BlockSpec((tb, Fp), lambda i: (i, 0)),   # x: tiled over batch
                const2d((Fp, H1p)), const2d((1, H1p)),
                const2d((H1p, H2p)), const2d((1, H2p)),
                const2d((H2p, Op)), const2d((1, Op)),
            ],
            out_specs=pl.BlockSpec((tb, Op), lambda i: (i, 0)),
            compiler_params=pltpu.CompilerParams(
                dimension_semantics=("parallel",),      # batch tiles shard TCs
                vmem_limit_bytes=vmem_limit),
            cost_estimate=cost,
        )(xp, w1, b1, w2, b2, w3, b3)

    try:
        out_padded = run(True)
    except Exception:
        # pipeline_mode=pl.Buffered(1) not supported on this jax build — fall
        # back to default double-buffering (identical numerics).
        out_padded = run(False)

    # Strip batch + lane padding.
    return out_padded[:B, :out_features]


def build_made_params(in_features, units, out_features,
                      natural_ordering=False, seed=0):
    """Reproduce MADE.__init__ mask construction + nn.Linear init, deterministically.

    Mirrors the given PyTorch module exactly, including its use of
    `out_features - 1` as the randint upper bound for hidden connectivity ids.
    """
    assert out_features % in_features == 0
    sizes = [in_features] + list(units) + [out_features]

    rng = np.random.RandomState(seed)
    ids = [np.arange(sizes[0]) if natural_ordering
           else rng.permutation(sizes[0])]
    for idx, size in enumerate(sizes[1:-1]):
        low = int(ids[idx].min())
        ids.append(rng.randint(low, out_features - 1, size=(size,)))
    ids.append(np.concatenate([ids[0]] * (out_features // in_features), axis=-1))

    # masks in PyTorch convention (out, in); last layer uses strict '>'
    masks = [(m[:, None] >= n[None, :]) for m, n in zip(ids[1:-1], ids[:-2])]
    masks.append(ids[-1][:, None] > ids[-2][None, :])

    # nn.Linear default init: U(-1/sqrt(fan_in), 1/sqrt(fan_in)) for W and b
    key = jax.random.PRNGKey(1)
    params = []
    for (hin, hout), mask in zip(zip(sizes[:-1], sizes[1:]), masks):
        key, kw, kb = jax.random.split(key, 3)
        bound = 1.0 / np.sqrt(hin)
        w = jax.random.uniform(kw, (hout, hin), jnp.float32, -bound, bound)
        b = jax.random.uniform(kb, (hout,), jnp.float32, -bound, bound)
        # pre-transpose to (in, out) for the kernel; mask likewise
        params.append((w.T,
                       jnp.asarray(mask.T, jnp.float32),
                       b.reshape(1, hout)))
    return params


def made_reference(x, params):
    """Pure-JAX f32 reference of the same forward (masked Linear + LeakyReLU(0.2))."""
    (w1, m1, b1), (w2, m2, b2), (w3, m3, b3) = params
    h = jnp.dot(x, w1 * m1) + b1
    h = jnp.where(h >= 0, h, 0.2 * h)
    h = jnp.dot(h, w2 * m2) + b2
    h = jnp.where(h >= 0, h, 0.2 * h)
    return jnp.dot(h, w3 * m3) + b3


if __name__ == "__main__":
    in_features = 8
    units = (32, 32)
    out_features = 16   # 2x in_features (e.g. mean + std chunks)
    batch = 8

    params = build_made_params(in_features, units, out_features,
                               natural_ordering=False, seed=0)
    fused_params = prepare_made_params(params)   # masks fused, bf16 weights

    x = jax.random.normal(jax.random.PRNGKey(0), (batch, in_features),
                          dtype=jnp.float32)

    out = made_forward(x, fused_params, out_features=out_features)
    out = jax.block_until_ready(out)

    ref = made_reference(x, params)
    assert out.shape == (batch, out_features)
    # bf16 weights/activations on the MXU with f32 accumulation: compare to the
    # f32 reference at a bf16-appropriate tolerance.
    np.testing.assert_allclose(np.asarray(out), np.asarray(ref),
                               rtol=2e-2, atol=2e-2)
    print("KERNEL_OK")
</pallas_src>

<mosaic_0001>
module attributes {stable_mosaic.version = 11 : i64} {
  func.func @made_kernel(%arg0: i32, %arg1: memref<8x8xbf16, #tpu.memory_space<vmem>>, %arg2: memref<8x128xbf16, #tpu.memory_space<vmem>>, %arg3: memref<1x128xf32, #tpu.memory_space<vmem>>, %arg4: memref<128x128xbf16, #tpu.memory_space<vmem>>, %arg5: memref<1x128xf32, #tpu.memory_space<vmem>>, %arg6: memref<128x128xbf16, #tpu.memory_space<vmem>>, %arg7: memref<1x128xf32, #tpu.memory_space<vmem>>, %arg8: memref<8x128xf32, #tpu.memory_space<vmem>>) attributes {dimension_semantics = [#tpu.dimension_semantics<parallel>], iteration_bounds = array<i64: 1>, scalar_prefetch = 0 : i64, scratch_operands = 0 : i64, tpu.core_type = #tpu.core_type<tc>, window_params = [{transform_indices = @transform_0, window_bounds = array<i64: 8, 8>}, {pipeline_mode = #tpu.pipeline_mode<synchronous>, transform_indices = @transform_1, window_bounds = array<i64: 8, 128>}, {pipeline_mode = #tpu.pipeline_mode<synchronous>, transform_indices = @transform_2, window_bounds = array<i64: 1, 128>}, {pipeline_mode = #tpu.pipeline_mode<synchronous>, transform_indices = @transform_3, window_bounds = array<i64: 128, 128>}, {pipeline_mode = #tpu.pipeline_mode<synchronous>, transform_indices = @transform_4, window_bounds = array<i64: 1, 128>}, {pipeline_mode = #tpu.pipeline_mode<synchronous>, transform_indices = @transform_5, window_bounds = array<i64: 128, 128>}, {pipeline_mode = #tpu.pipeline_mode<synchronous>, transform_indices = @transform_6, window_bounds = array<i64: 1, 128>}, {transform_indices = @transform_7, window_bounds = array<i64: 8, 128>}]} {
    %c0 = arith.constant 0 : index
    %c0_0 = arith.constant 0 : index
    %0 = vector.load %arg1[%c0, %c0_0] : memref<8x8xbf16, #tpu.memory_space<vmem>>, vector<8x8xbf16>
    %c0_1 = arith.constant 0 : index
    %c0_2 = arith.constant 0 : index
    %1 = vector.load %arg2[%c0_1, %c0_2] : memref<8x128xbf16, #tpu.memory_space<vmem>>, vector<8x128xbf16>
    %cst = arith.constant dense<0.000000e+00> : vector<8x128xf32>
    %2 = tpu.matmul %0, %1, %cst {dimension_numbers = #tpu.dot_dimension_numbers<[1], [0], [0], [1], [0, 0, 1, 1], [], []>} : vector<8x8xbf16>, vector<8x128xbf16>, vector<8x128xf32> -> vector<8x128xf32>
    %c0_3 = arith.constant 0 : index
    %c0_4 = arith.constant 0 : index
    %3 = vector.load %arg3[%c0_3, %c0_4] : memref<1x128xf32, #tpu.memory_space<vmem>>, vector<1x128xf32>
    %4 = vector.broadcast %3 : vector<1x128xf32> to vector<8x128xf32>
    %5 = arith.addf %2, %4 : vector<8x128xf32>
    %cst_5 = arith.constant 0.000000e+00 : f32
    %6 = vector.broadcast %cst_5 : f32 to vector<8x128xf32>
    %7 = arith.cmpf oge, %5, %6 : vector<8x128xf32>
    %cst_6 = arith.constant 2.000000e-01 : f32
    %8 = vector.broadcast %cst_6 : f32 to vector<8x128xf32>
    %9 = arith.mulf %8, %5 : vector<8x128xf32>
    %10 = arith.select %7, %5, %9 : vector<8x128xi1>, vector<8x128xf32>
    %11 = arith.truncf %10 : vector<8x128xf32> to vector<8x128xbf16>
    %c0_7 = arith.constant 0 : index
    %c0_8 = arith.constant 0 : index
    %12 = vector.load %arg4[%c0_7, %c0_8] : memref<128x128xbf16, #tpu.memory_space<vmem>>, vector<128x128xbf16>
    %cst_9 = arith.constant dense<0.000000e+00> : vector<8x128xf32>
    %13 = tpu.matmul %11, %12, %cst_9 {dimension_numbers = #tpu.dot_dimension_numbers<[1], [0], [0], [1], [0, 0, 1, 1], [], []>} : vector<8x128xbf16>, vector<128x128xbf16>, vector<8x128xf32> -> vector<8x128xf32>
    %c0_10 = arith.constant 0 : index
    %c0_11 = arith.constant 0 : index
    %14 = vector.load %arg5[%c0_10, %c0_11] : memref<1x128xf32, #tpu.memory_space<vmem>>, vector<1x128xf32>
    %15 = vector.broadcast %14 : vector<1x128xf32> to vector<8x128xf32>
    %16 = arith.addf %13, %15 : vector<8x128xf32>
    %cst_12 = arith.constant 0.000000e+00 : f32
    %17 = vector.broadcast %cst_12 : f32 to vector<8x128xf32>
    %18 = arith.cmpf oge, %16, %17 : vector<8x128xf32>
    %cst_13 = arith.constant 2.000000e-01 : f32
    %19 = vector.broadcast %cst_13 : f32 to vector<8x128xf32>
    %20 = arith.mulf %19, %16 : vector<8x128xf32>
    %21 = arith.select %18, %16, %20 : vector<8x128xi1>, vector<8x128xf32>
    %22 = arith.truncf %21 : vector<8x128xf32> to vector<8x128xbf16>
    %c0_14 = arith.constant 0 : index
    %c0_15 = arith.constant 0 : index
    %23 = vector.load %arg6[%c0_14, %c0_15] : memref<128x128xbf16, #tpu.memory_space<vmem>>, vector<128x128xbf16>
    %cst_16 = arith.constant dense<0.000000e+00> : vector<8x128xf32>
    %24 = tpu.matmul %22, %23, %cst_16 {dimension_numbers = #tpu.dot_dimension_numbers<[1], [0], [0], [1], [0, 0, 1, 1], [], []>} : vector<8x128xbf16>, vector<128x128xbf16>, vector<8x128xf32> -> vector<8x128xf32>
    %c0_17 = arith.constant 0 : index
    %c0_18 = arith.constant 0 : index
    %25 = vector.load %arg7[%c0_17, %c0_18] : memref<1x128xf32, #tpu.memory_space<vmem>>, vector<1x128xf32>
    %26 = vector.broadcast %25 : vector<1x128xf32> to vector<8x128xf32>
    %27 = arith.addf %24, %26 : vector<8x128xf32>
    %c0_19 = arith.constant 0 : index
    %c0_20 = arith.constant 0 : index
    %28 = vector.load %arg8[%c0_19, %c0_20] : memref<8x128xf32, #tpu.memory_space<vmem>>, vector<8x128xf32>
    tpu.vector_store %arg8[%c0_19, %c0_20], %27 {strides = array<i32>} : memref<8x128xf32, #tpu.memory_space<vmem>>, vector<8x128xf32>,
    return
  }
  func.func @transform_0(%arg0: i32) -> (i32, i32) {
    %c0_i32 = arith.constant 0 : i32
    %c0_i32_0 = arith.constant 0 : i32
    return %arg0, %c0_i32 : i32, i32
  }
  func.func @transform_1(%arg0: i32) -> (i32, i32) {
    %c0_i32 = arith.constant 0 : i32
    %c0_i32_0 = arith.constant 0 : i32
    %c0_i32_1 = arith.constant 0 : i32
    return %c0_i32, %c0_i32_0 : i32, i32
  }
  func.func @transform_2(%arg0: i32) -> (i32, i32) {
    %c0_i32 = arith.constant 0 : i32
    %c0_i32_0 = arith.constant 0 : i32
    %c0_i32_1 = arith.constant 0 : i32
    return %c0_i32, %c0_i32_0 : i32, i32
  }
  func.func @transform_3(%arg0: i32) -> (i32, i32) {
    %c0_i32 = arith.constant 0 : i32
    %c0_i32_0 = arith.constant 0 : i32
    %c0_i32_1 = arith.constant 0 : i32
    return %c0_i32, %c0_i32_0 : i32, i32
  }
  func.func @transform_4(%arg0: i32) -> (i32, i32) {
    %c0_i32 = arith.constant 0 : i32
    %c0_i32_0 = arith.constant 0 : i32
    %c0_i32_1 = arith.constant 0 : i32
    return %c0_i32, %c0_i32_0 : i32, i32
  }
  func.func @transform_5(%arg0: i32) -> (i32, i32) {
    %c0_i32 = arith.constant 0 : i32
    %c0_i32_0 = arith.constant 0 : i32
    %c0_i32_1 = arith.constant 0 : i32
    return %c0_i32, %c0_i32_0 : i32, i32
  }
  func.func @transform_6(%arg0: i32) -> (i32, i32) {
    %c0_i32 = arith.constant 0 : i32
    %c0_i32_0 = arith.constant 0 : i32
    %c0_i32_1 = arith.constant 0 : i32
    return %c0_i32, %c0_i32_0 : i32, i32
  }
  func.func @transform_7(%arg0: i32) -> (i32, i32) {
    %c0_i32 = arith.constant 0 : i32
    %c0_i32_0 = arith.constant 0 : i32
    return %arg0, %c0_i32 : i32, i32
  }
}

module attributes {stable_mosaic.version = 11 : i64} {
  func.func @made_kernel(%arg0: i32, %arg1: memref<8x8xbf16, #tpu.memory_space<vmem>>, %arg2: memref<8x128xbf16, #tpu.memory_space<vmem>>, %arg3: memref<1x128xf32, #tpu.memory_space<vmem>>, %arg4: memref<128x128xbf16, #tpu.memory_space<vmem>>, %arg5: memref<1x128xf32, #tpu.memory_space<vmem>>, %arg6: memref<128x128xbf16, #tpu.memory_space<vmem>>, %arg7: memref<1x128xf32, #tpu.memory_space<vmem>>, %arg8: memref<8x128xf32, #tpu.memory_space<vmem>>) attributes {dimension_semantics = [#tpu.dimension_semantics<parallel>], iteration_bounds = array<i64: 1>, scalar_prefetch = 0 : i64, scratch_operands = 0 : i64, tpu.core_type = #tpu.core_type<tc>, window_params = [{transform_indices = @transform_0, window_bounds = array<i64: 8, 8>}, {pipeline_mode = #tpu.pipeline_mode<synchronous>, transform_indices = @transform_1, window_bounds = array<i64: 8, 128>}, {pipeline_mode = #tpu.pipeline_mode<synchronous>, transform_indices = @transform_2, window_bounds = array<i64: 1, 128>}, {pipeline_mode = #tpu.pipeline_mode<synchronous>, transform_indices = @transform_3, window_bounds = array<i64: 128, 128>}, {pipeline_mode = #tpu.pipeline_mode<synchronous>, transform_indices = @transform_4, window_bounds = array<i64: 1, 128>}, {pipeline_mode = #tpu.pipeline_mode<synchronous>, transform_indices = @transform_5, window_bounds = array<i64: 128, 128>}, {pipeline_mode = #tpu.pipeline_mode<synchronous>, transform_indices = @transform_6, window_bounds = array<i64: 1, 128>}, {transform_indices = @transform_7, window_bounds = array<i64: 8, 128>}]} {
    %c0 = arith.constant 0 : index
    %c0_0 = arith.constant 0 : index
    %0 = vector.load %arg1[%c0, %c0_0] : memref<8x8xbf16, #tpu.memory_space<vmem>>, vector<8x8xbf16>
    %c0_1 = arith.constant 0 : index
    %c0_2 = arith.constant 0 : index
    %1 = vector.load %arg2[%c0_1, %c0_2] : memref<8x128xbf16, #tpu.memory_space<vmem>>, vector<8x128xbf16>
    %cst = arith.constant dense<0.000000e+00> : vector<8x128xf32>
    %2 = tpu.matmul %0, %1, %cst {dimension_numbers = #tpu.dot_dimension_numbers<[1], [0], [0], [1], [0, 0, 1, 1], [], []>} : vector<8x8xbf16>, vector<8x128xbf16>, vector<8x128xf32> -> vector<8x128xf32>
    %c0_3 = arith.constant 0 : index
    %c0_4 = arith.constant 0 : index
    %3 = vector.load %arg3[%c0_3, %c0_4] : memref<1x128xf32, #tpu.memory_space<vmem>>, vector<1x128xf32>
    %4 = vector.broadcast %3 : vector<1x128xf32> to vector<8x128xf32>
    %5 = arith.addf %2, %4 : vector<8x128xf32>
    %cst_5 = arith.constant 0.000000e+00 : f32
    %6 = vector.broadcast %cst_5 : f32 to vector<8x128xf32>
    %7 = arith.cmpf oge, %5, %6 : vector<8x128xf32>
    %cst_6 = arith.constant 2.000000e-01 : f32
    %8 = vector.broadcast %cst_6 : f32 to vector<8x128xf32>
    %9 = arith.mulf %8, %5 : vector<8x128xf32>
    %10 = arith.select %7, %5, %9 : vector<8x128xi1>, vector<8x128xf32>
    %11 = arith.truncf %10 : vector<8x128xf32> to vector<8x128xbf16>
    %c0_7 = arith.constant 0 : index
    %c0_8 = arith.constant 0 : index
    %12 = vector.load %arg4[%c0_7, %c0_8] : memref<128x128xbf16, #tpu.memory_space<vmem>>, vector<128x128xbf16>
    %cst_9 = arith.constant dense<0.000000e+00> : vector<8x128xf32>
    %13 = tpu.matmul %11, %12, %cst_9 {dimension_numbers = #tpu.dot_dimension_numbers<[1], [0], [0], [1], [0, 0, 1, 1], [], []>} : vector<8x128xbf16>, vector<128x128xbf16>, vector<8x128xf32> -> vector<8x128xf32>
    %c0_10 = arith.constant 0 : index
    %c0_11 = arith.constant 0 : index
    %14 = vector.load %arg5[%c0_10, %c0_11] : memref<1x128xf32, #tpu.memory_space<vmem>>, vector<1x128xf32>
    %15 = vector.broadcast %14 : vector<1x128xf32> to vector<8x128xf32>
    %16 = arith.addf %13, %15 : vector<8x128xf32>
    %cst_12 = arith.constant 0.000000e+00 : f32
    %17 = vector.broadcast %cst_12 : f32 to vector<8x128xf32>
    %18 = arith.cmpf oge, %16, %17 : vector<8x128xf32>
    %cst_13 = arith.constant 2.000000e-01 : f32
    %19 = vector.broadcast %cst_13 : f32 to vector<8x128xf32>
    %20 = arith.mulf %19, %16 : vector<8x128xf32>
    %21 = arith.select %18, %16, %20 : vector<8x128xi1>, vector<8x128xf32>
    %22 = arith.truncf %21 : vector<8x128xf32> to vector<8x128xbf16>
    %c0_14 = arith.constant 0 : index
    %c0_15 = arith.constant 0 : index
    %23 = vector.load %arg6[%c0_14, %c0_15] : memref<128x128xbf16, #tpu.memory_space<vmem>>, vector<128x128xbf16>
    %cst_16 = arith.constant dense<0.000000e+00> : vector<8x128xf32>
    %24 = tpu.matmul %22, %23, %cst_16 {dimension_numbers = #tpu.dot_dimension_numbers<[1], [0], [0], [1], [0, 0, 1, 1], [], []>} : vector<8x128xbf16>, vector<128x128xbf16>, vector<8x128xf32> -> vector<8x128xf32>
    %c0_17 = arith.constant 0 : index
    %c0_18 = arith.constant 0 : index
    %25 = vector.load %arg7[%c0_17, %c0_18] : memref<1x128xf32, #tpu.memory_space<vmem>>, vector<1x128xf32>
    %26 = vector.broadcast %25 : vector<1x128xf32> to vector<8x128xf32>
    %27 = arith.addf %24, %26 : vector<8x128xf32>
    %c0_19 = arith.constant 0 : index
    %c0_20 = arith.constant 0 : index
    %28 = vector.load %arg8[%c0_19, %c0_20] : memref<8x128xf32, #tpu.memory_space<vmem>>, vector<8x128xf32>
    tpu.vector_store %arg8[%c0_19, %c0_20], %27 {strides = array<i32>} : memref<8x128xf32, #tpu.memory_space<vmem>>, vector<8x128xf32>,
    return
  }
  func.func @transform_0(%arg0: i32) -> (i32, i32) {
    %c0_i32 = arith.constant 0 : i32
    %c0_i32_0 = arith.constant 0 : i32
    return %arg0, %c0_i32 : i32, i32
  }
  func.func @transform_1(%arg0: i32) -> (i32, i32) {
    %c0_i32 = arith.constant 0 : i32
    %c0_i32_0 = arith.constant 0 : i32
    %c0_i32_1 = arith.constant 0 : i32
    return %c0_i32, %c0_i32_0 : i32, i32
  }
  func.func @transform_2(%arg0: i32) -> (i32, i32) {
    %c0_i32 = arith.constant 0 : i32
    %c0_i32_0 = arith.constant 0 : i32
    %c0_i32_1 = arith.constant 0 : i32
    return %c0_i32, %c0_i32_0 : i32, i32
  }
  func.func @transform_3(%arg0: i32) -> (i32, i32) {
    %c0_i32 = arith.constant 0 : i32
    %c0_i32_0 = arith.constant 0 : i32
    %c0_i32_1 = arith.constant 0 : i32
    return %c0_i32, %c0_i32_0 : i32, i32
  }
  func.func @transform_4(%arg0: i32) -> (i32, i32) {
    %c0_i32 = arith.constant 0 : i32
    %c0_i32_0 = arith.constant 0 : i32
    %c0_i32_1 = arith.constant 0 : i32
    return %c0_i32, %c0_i32_0 : i32, i32
  }
  func.func @transform_5(%arg0: i32) -> (i32, i32) {
    %c0_i32 = arith.constant 0 : i32
    %c0_i32_0 = arith.constant 0 : i32
    %c0_i32_1 = arith.constant 0 : i32
    return %c0_i32, %c0_i32_0 : i32, i32
  }
  func.func @transform_6(%arg0: i32) -> (i32, i32) {
    %c0_i32 = arith.constant 0 : i32
    %c0_i32_0 = arith.constant 0 : i32
    %c0_i32_1 = arith.constant 0 : i32
    return %c0_i32, %c0_i32_0 : i32, i32
  }
  func.func @transform_7(%arg0: i32) -> (i32, i32) {
    %c0_i32 = arith.constant 0 : i32
    %c0_i32_0 = arith.constant 0 : i32
    return %arg0, %c0_i32 : i32, i32
  }
}

</mosaic_0001>

<llo_original>
// kernel: tpu_custom_call.1
$region0: #{tpu_custom_call.1}
  #allocation0 [shape = 'u32[]', space=smem, size = 0x4, offset = 0x4, fixed_abs, tag = 'smem constant byte address 0x4 - core index']
  #allocation1 [shape = 'u32[72,128]{1,0:T(1,128)}', space=vmem, size = 0x9000, scoped, tag = 'internal scratch']
  %s0 = inlined_call_operand.hbm [shape: bf16[8,8], index: 0, kind: input, shape index: {}]
  %s1 = inlined_call_operand.hbm [shape: bf16[8,128], index: 1, kind: input, shape index: {}]
  %s2 = inlined_call_operand.vmem [shape: f32[1,128], index: 2, kind: input, shape index: {}]
  %s3 = inlined_call_operand.hbm [shape: bf16[128,128], index: 3, kind: input, shape index: {}]
  %s4 = inlined_call_operand.vmem [shape: f32[1,128], index: 4, kind: input, shape index: {}]
  %s5 = inlined_call_operand.hbm [shape: bf16[128,128], index: 5, kind: input, shape index: {}]
  %s6 = inlined_call_operand.vmem [shape: f32[1,128], index: 6, kind: input, shape index: {}]
  %s7 = inlined_call_operand.hbm [shape: f32[8,128], index: 7, kind: output, shape index: {}]
  %s8 = sld [smem:[#allocation0]]
  $region54: #{tpu_custom_call.1} parent=0
    _
  %s10 = ssub.s32 1, %s8
  %s11 = scalar_select 0, %s10, %s8
  $region1: #{tpu_custom_call.1} parent=0
    #allocation2 [shape = 'u8[2048]{0}', space=vmem, size = 0x800, scoped, tag = 'input window, operand 0, single buffered']
    #allocation3 [shape = 's32[1]{0}', space=sflag, size = 0x4, scoped, tag = 'scoped memory for tpu_custom_call.1']
    #allocation4 [shape = 's32[1]{0}', space=sflag, size = 0x4, scoped, tag = 'scoped memory for tpu_custom_call.1']
    #allocation5 [shape = 'u8[2048]{0}', space=vmem, size = 0x800, scoped, tag = 'input window, operand 1, single buffered']
    #allocation6 [shape = 's32[1]{0}', space=sflag, size = 0x4, scoped, tag = 'scoped memory for tpu_custom_call.1']
    #allocation7 [shape = 'u8[32768]{0}', space=vmem, size = 0x8000, scoped, tag = 'input window, operand 3, single buffered']
    #allocation8 [shape = 'u8[32768]{0}', space=vmem, size = 0x8000, scoped, tag = 'input window, operand 5, single buffered']
    #allocation9 [shape = 's32[1]{0}', space=sflag, size = 0x4, scoped, tag = 'scoped memory for tpu_custom_call.1']
    #allocation10 [shape = 'u8[4096]{0}', space=vmem, size = 0x1000, scoped, tag = 'output window, operand 0, single buffered']
    %12 = vsyncpa [#allocation3], 0
    %13 = vsyncpa [#allocation6], 0
    %14 = vsyncpa [#allocation9], 0
    %15 = vsyncpa [#allocation4], 0
    // Predicated region
    $region2: #{tpu_custom_call.1} parent=1 // pred_check
      _
    $region3: #{tpu_custom_call.1} parent=1 // pred_check_branch
      %17 = sbr.rel (0) target = $region5
    $region4: #{tpu_custom_call.1} parent=1 // pred_region
      %19 = vsyncadd [#allocation3], 0
      %s21 = sshll.u32 %s0, 4
      %s22 = int_to_ptr.hbm [resolvable:$true] %s21
      %s23 = sshll.u32 [#allocation2], 4
      %s24 = int_to_ptr.vmem [resolvable:$true] %s23
      %26 = dma.hbm_to_vmem [thread:$0]  %s22, 64, %s24, [#allocation3]
    $region5: #{tpu_custom_call.1} parent=1 // pred_fallthru
      _
    // Predicated region
    $region6: #{tpu_custom_call.1} parent=1 // pred_check
      _
    $region7: #{tpu_custom_call.1} parent=1 // pred_check_branch
      %28 = sbr.rel (0) target = $region9
    $region8: #{tpu_custom_call.1} parent=1 // pred_region
      %30 = vsyncadd [#allocation6], 0
      %s32 = sshll.u32 %s1, 4
      %s33 = int_to_ptr.hbm [resolvable:$true] %s32
      %s34 = sshll.u32 [#allocation5], 4
      %s35 = int_to_ptr.vmem [resolvable:$true] %s34
      %37 = dma.hbm_to_vmem [thread:$0]  %s33, 64, %s35, [#allocation6]
    $region9: #{tpu_custom_call.1} parent=1 // pred_fallthru
      _
    // Predicated region
    $region10: #{tpu_custom_call.1} parent=1 // pred_check
      _
    $region11: #{tpu_custom_call.1} parent=1 // pred_check_branch
      %39 = sbr.rel (0) target = $region13
    $region12: #{tpu_custom_call.1} parent=1 // pred_region
      _
    $region13: #{tpu_custom_call.1} parent=1 // pred_fallthru
      _
    // Predicated region
    $region14: #{tpu_custom_call.1} parent=1 // pred_check
      _
    $region15: #{tpu_custom_call.1} parent=1 // pred_check_branch
      %41 = sbr.rel (0) target = $region17
    $region16: #{tpu_custom_call.1} parent=1 // pred_region
      %43 = vsyncadd [#allocation6], 0
      %s44 = sshll.u32 %s3, 4
      %s45 = int_to_ptr.hbm [resolvable:$true] %s44
      %s46 = sshll.u32 [#allocation7], 4
      %s47 = int_to_ptr.vmem [resolvable:$true] %s46
      %52 = dma.hbm_to_vmem [thread:$0]  %s45, 1024, %s47, [#allocation6], 64, 64, 4
    $region17: #{tpu_custom_call.1} parent=1 // pred_fallthru
      _
    // Predicated region
    $region18: #{tpu_custom_call.1} parent=1 // pred_check
      _
    $region19: #{tpu_custom_call.1} parent=1 // pred_check_branch
      %54 = sbr.rel (0) target = $region21
    $region20: #{tpu_custom_call.1} parent=1 // pred_region
      _
    $region21: #{tpu_custom_call.1} parent=1 // pred_fallthru
      _
    // Predicated region
    $region22: #{tpu_custom_call.1} parent=1 // pred_check
      _
    $region23: #{tpu_custom_call.1} parent=1 // pred_check_branch
      %56 = sbr.rel (0) target = $region25
    $region24: #{tpu_custom_call.1} parent=1 // pred_region
      %58 = vsyncadd [#allocation9], 0
      %s59 = sshll.u32 %s5, 4
      %s60 = int_to_ptr.hbm [resolvable:$true] %s59
      %s61 = sshll.u32 [#allocation8], 4
      %s62 = int_to_ptr.vmem [resolvable:$true] %s61
      %67 = dma.hbm_to_vmem [thread:$0]  %s60, 1024, %s62, [#allocation9], 64, 64, 4
    $region25: #{tpu_custom_call.1} parent=1 // pred_fallthru
      _
    // Predicated region
    $region26: #{tpu_custom_call.1} parent=1 // pred_check
      _
    $region27: #{tpu_custom_call.1} parent=1 // pred_check_branch
      %69 = sbr.rel (0) target = $region29
    $region28: #{tpu_custom_call.1} parent=1 // pred_region
      _
    $region29: #{tpu_custom_call.1} parent=1 // pred_fallthru
      _
    // Predicated region
    $region30: #{tpu_custom_call.1} parent=1 // pred_check
      _
    $region31: #{tpu_custom_call.1} parent=1 // pred_check_branch
      %71 = sbr.rel (0) target = $region33
    $region32: #{tpu_custom_call.1} parent=1 // pred_region
      %73 = dma.done [#allocation3], 64
    $region33: #{tpu_custom_call.1} parent=1 // pred_fallthru
      _
    // Predicated region
    $region34: #{tpu_custom_call.1} parent=1 // pred_check
      _
    $region35: #{tpu_custom_call.1} parent=1 // pred_check_branch
      %75 = sbr.rel (0) target = $region37
    $region36: #{tpu_custom_call.1} parent=1 // pred_region
      %77 = dma.done [#allocation6], 64
    $region37: #{tpu_custom_call.1} parent=1 // pred_fallthru
      _
    // Predicated region
    $region38: #{tpu_custom_call.1} parent=1 // pred_check
      _
    $region39: #{tpu_custom_call.1} parent=1 // pred_check_branch
      %79 = sbr.rel (0) target = $region41
    $region40: #{tpu_custom_call.1} parent=1 // pred_region
      %81 = dma.done [#allocation6], 1024
    $region41: #{tpu_custom_call.1} parent=1 // pred_fallthru
      _
    // Predicated region
    $region42: #{tpu_custom_call.1} parent=1 // pred_check
      _
    $region43: #{tpu_custom_call.1} parent=1 // pred_check_branch
      %83 = sbr.rel (0) target = $region45
    $region44: #{tpu_custom_call.1} parent=1 // pred_region
      %85 = dma.done [#allocation9], 1024
    $region45: #{tpu_custom_call.1} parent=1 // pred_fallthru
      _
    %v87 = vld [vmem:[#allocation2] sm:$0xf]
    %v88 = vld [vmem:[#allocation5] sm:$0xf]
    %v89 = vld [vmem:[%s2] sm:$0x1]
    %v91 = vperm.slane %v89, 0
    %vm93 = vcmask 64512
    %v95 = vsel %vm93, %v87, 0
    %vm97 = vcmask 1043456
    %v99 = vsel %vm97, %v88, 0
    %101 = vmatpush.bf16.msra.mxu0 0
    %102 = vmatpush.bf16.msra.mxu0 0
    %103 = vmatpush.bf16.msra.mxu0 0
    %104 = vmatpush.bf16.msra.mxu0 0
    %105 = vmatpush.bf16.msra.mxu0 0
    %106 = vmatpush.bf16.msra.mxu0 0
    %107 = vmatpush.bf16.msra.mxu0 0
    %108 = vmatpush.bf16.msra.mxu0 %v99
    %109 = vmatmul.bf16.gmra.mxu0 %v95
    %v110 = vpop.f32.mrf.mxu0
    %v111 = vadd.f32 %v91, %v110
    %v112 = vpop.f32.mrf.mxu0
    %113 = vdwg.mxu0
    %vm114 = vcmp.ge.f32.partialorder %v111, 0.0
    %v115 = vmul.f32 %v111, 0.2
    %v116 = vsel %vm114, %v111, %v115
    %v117 = vpack.c.bf16 %v116, %v116
    %v118 = vld [vmem:[#allocation7] sm:$0xf]
    %v119 = vld [vmem:[#allocation7 + $0x4] sm:$0xf]
    %v120 = vld [vmem:[#allocation7 + $0x8] sm:$0xf]
    %v121 = vld [vmem:[#allocation7 + $0xc] sm:$0xf]
    %v122 = vld [vmem:[#allocation7 + $0x10] sm:$0xf]
    %v123 = vld [vmem:[#allocation7 + $0x14] sm:$0xf]
    %v124 = vld [vmem:[#allocation7 + $0x18] sm:$0xf]
    %v125 = vld [vmem:[#allocation7 + $0x1c] sm:$0xf]
    %v126 = vld [vmem:[#allocation7 + $0x20] sm:$0xf]
    %v127 = vld [vmem:[#allocation7 + $0x24] sm:$0xf]
    %v128 = vld [vmem:[#allocation7 + $0x28] sm:$0xf]
    %v129 = vld [vmem:[#allocation7 + $0x2c] sm:$0xf]
    %v130 = vld [vmem:[#allocation7 + $0x30] sm:$0xf]
    %v131 = vld [vmem:[#allocation7 + $0x34] sm:$0xf]
    %v132 = vld [vmem:[#allocation7 + $0x38] sm:$0xf]
    %v133 = vld [vmem:[#allocation7 + $0x3c] sm:$0xf]
    %v134 = vld [vmem:[%s4] sm:$0x1]
    %v136 = vperm.slane %v134, 0
    %v154 = vunpack.c.l.b16 %v118
    %v155 = vunpack.c.l.b16 %v119
    %v156 = vunpack.c.l.b16 %v120
    %v157 = vunpack.c.l.b16 %v121
    %v158 = vunpack.c.l.b16 %v122
    %v159 = vunpack.c.l.b16 %v123
    %v160 = vunpack.c.l.b16 %v124
    %v161 = vunpack.c.l.b16 %v125
    %v162 = vunpack.c.l.b16 %v126
    %v163 = vunpack.c.l.b16 %v127
    %v164 = vunpack.c.l.b16 %v128
    %v165 = vunpack.c.l.b16 %v129
    %v166 = vunpack.c.l.b16 %v130
    %v167 = vunpack.c.l.b16 %v131
    %v168 = vunpack.c.l.b16 %v132
    %v169 = vunpack.c.l.b16 %v133
    %v170 = vpack.c.b16 %v155, %v154
    %v171 = vpack.c.b16 %v157, %v156
    %v172 = vpack.c.b16 %v159, %v158
    %v173 = vpack.c.b16 %v161, %v160
    %v174 = vpack.c.b16 %v163, %v162
    %v175 = vpack.c.b16 %v165, %v164
    %v176 = vpack.c.b16 %v167, %v166
    %v177 = vpack.c.b16 %v169, %v168
    %186 = vmatpush.bf16.msra.mxu0 %v177
    %187 = vmatpush.bf16.msra.mxu0 %v176
    %188 = vmatpush.bf16.msra.mxu0 %v175
    %189 = vmatpush.bf16.msra.mxu0 %v174
    %190 = vmatpush.bf16.msra.mxu0 %v173
    %191 = vmatpush.bf16.msra.mxu0 %v172
    %192 = vmatpush.bf16.msra.mxu0 %v171
    %193 = vmatpush.bf16.msra.mxu0 %v170
    %194 = vmatmul.bf16.gmra.mxu0 %v117
    %v195 = vpop.f32.mrf.mxu0
    %v196 = vadd.f32 %v136, %v195
    %v197 = vpop.f32.mrf.mxu0
    %198 = vdwg.mxu0
    %vm199 = vcmp.ge.f32.partialorder %v196, 0.0
    %v200 = vmul.f32 %v196, 0.2
    %v201 = vsel %vm199, %v196, %v200
    %v202 = vpack.c.bf16 %v201, %v201
    %v203 = vld [vmem:[#allocation8] sm:$0xf]
    %v204 = vld [vmem:[#allocation8 + $0x4] sm:$0xf]
    %v205 = vld [vmem:[#allocation8 + $0x8] sm:$0xf]
    %v206 = vld [vmem:[#allocation8 + $0xc] sm:$0xf]
    %v207 = vld [vmem:[#allocation8 + $0x10] sm:$0xf]
    %v208 = vld [vmem:[#allocation8 + $0x14] sm:$0xf]
    %v209 = vld [vmem:[#allocation8 + $0x18] sm:$0xf]
    %v210 = vld [vmem:[#allocation8 + $0x1c] sm:$0xf]
    %v211 = vld [vmem:[#allocation8 + $0x20] sm:$0xf]
    %v212 = vld [vmem:[#allocation8 + $0x24] sm:$0xf]
    %v213 = vld [vmem:[#allocation8 + $0x28] sm:$0xf]
    %v214 = vld [vmem:[#allocation8 + $0x2c] sm:$0xf]
    %v215 = vld [vmem:[#allocation8 + $0x30] sm:$0xf]
    %v216 = vld [vmem:[#allocation8 + $0x34] sm:$0xf]
    %v217 = vld [vmem:[#allocation8 + $0x38] sm:$0xf]
    %v218 = vld [vmem:[#allocation8 + $0x3c] sm:$0xf]
    %v219 = vld [vmem:[%s6] sm:$0x1]
    %v221 = vperm.slane %v219, 0
    %v239 = vunpack.c.l.b16 %v203
    %v240 = vunpack.c.l.b16 %v204
    %v241 = vunpack.c.l.b16 %v205
    %v242 = vunpack.c.l.b16 %v206
    %v243 = vunpack.c.l.b16 %v207
    %v244 = vunpack.c.l.b16 %v208
    %v245 = vunpack.c.l.b16 %v209
    %v246 = vunpack.c.l.b16 %v210
    %v247 = vunpack.c.l.b16 %v211
    %v248 = vunpack.c.l.b16 %v212
    %v249 = vunpack.c.l.b16 %v213
    %v250 = vunpack.c.l.b16 %v214
    %v251 = vunpack.c.l.b16 %v215
    %v252 = vunpack.c.l.b16 %v216
    %v253 = vunpack.c.l.b16 %v217
    %v254 = vunpack.c.l.b16 %v218
    %v255 = vpack.c.b16 %v240, %v239
    %v256 = vpack.c.b16 %v242, %v241
    %v257 = vpack.c.b16 %v244, %v243
    %v258 = vpack.c.b16 %v246, %v245
    %v259 = vpack.c.b16 %v248, %v247
    %v260 = vpack.c.b16 %v250, %v249
    %v261 = vpack.c.b16 %v252, %v251
    %v262 = vpack.c.b16 %v254, %v253
    %271 = vmatpush.bf16.msra.mxu0 %v262
    %272 = vmatpush.bf16.msra.mxu0 %v261
    %273 = vmatpush.bf16.msra.mxu0 %v260
    %274 = vmatpush.bf16.msra.mxu0 %v259
    %275 = vmatpush.bf16.msra.mxu0 %v258
    %276 = vmatpush.bf16.msra.mxu0 %v257
    %277 = vmatpush.bf16.msra.mxu0 %v256
    %278 = vmatpush.bf16.msra.mxu0 %v255
    %279 = vmatmul.bf16.gmra.mxu0 %v202
    %v280 = vpop.f32.mrf.mxu0
    %v281 = vadd.f32 %v221, %v280
    %v282 = vpop.f32.mrf.mxu0
    %283 = vdwg.mxu0
    %284 = vst [vmem:[#allocation10] sm:$0xff] %v281
    // Predicated region
    $region46: #{tpu_custom_call.1} parent=1 // pred_check
      _
    $region47: #{tpu_custom_call.1} parent=1 // pred_check_branch
      %286 = sbr.rel (0) target = $region49
    $region48: #{tpu_custom_call.1} parent=1 // pred_region
      %288 = vsyncadd [#allocation4], 0
      %s290 = sshll.u32 [#allocation10], 4
      %s291 = int_to_ptr.vmem [resolvable:$true] %s290
      %s292 = sshll.u32 %s7, 4
      %s293 = int_to_ptr.hbm [resolvable:$true] %s292
      %295 = dma.vmem_to_hbm [thread:$0]  %s291, 128, %s293, [#allocation4]
    $region49: #{tpu_custom_call.1} parent=1 // pred_fallthru
      _
    // Predicated region
    $region50: #{tpu_custom_call.1} parent=1 // pred_check
      _
    $region51: #{tpu_custom_call.1} parent=1 // pred_check_branch
      %297 = sbr.rel (0) target = $region53
    $region52: #{tpu_custom_call.1} parent=1 // pred_region
      %299 = dma.done [#allocation4], 128
    $region53: #{tpu_custom_call.1} parent=1 // pred_fallthru
      _
    %300 = vsyncpa [#allocation3], 1
    %301 = vsyncpa [#allocation6], 1
    %302 = vsyncpa [#allocation9], 1
    %303 = vsyncpa [#allocation4], 1

// kernel: tpu_custom_call.1
$region0: #{tpu_custom_call.1}
  #allocation0 [shape = 'u32[]', space=smem, size = 0x4, offset = 0x4, fixed_abs, tag = 'smem constant byte address 0x4 - core index']
  #allocation1 [shape = 'u32[72,128]{1,0:T(1,128)}', space=vmem, size = 0x9000, scoped, tag = 'internal scratch']
  %s0 = inlined_call_operand.hbm [shape: bf16[8,8], index: 0, kind: input, shape index: {}]
  %s1 = inlined_call_operand.hbm [shape: bf16[8,128], index: 1, kind: input, shape index: {}]
  %s2 = inlined_call_operand.vmem [shape: f32[1,128], index: 2, kind: input, shape index: {}]
  %s3 = inlined_call_operand.hbm [shape: bf16[128,128], index: 3, kind: input, shape index: {}]
  %s4 = inlined_call_operand.vmem [shape: f32[1,128], index: 4, kind: input, shape index: {}]
  %s5 = inlined_call_operand.hbm [shape: bf16[128,128], index: 5, kind: input, shape index: {}]
  %s6 = inlined_call_operand.vmem [shape: f32[1,128], index: 6, kind: input, shape index: {}]
  %s7 = inlined_call_operand.hbm [shape: f32[8,128], index: 7, kind: output, shape index: {}]
  %s8 = sld [smem:[#allocation0]]
  $region54: #{tpu_custom_call.1} parent=0
    _
  %s10 = ssub.s32 1, %s8
  %s11 = scalar_select 0, %s10, %s8
  $region1: #{tpu_custom_call.1} parent=0
    #allocation2 [shape = 'u8[2048]{0}', space=vmem, size = 0x800, scoped, tag = 'input window, operand 0, single buffered']
    #allocation3 [shape = 's32[1]{0}', space=sflag, size = 0x4, scoped, tag = 'scoped memory for tpu_custom_call.1']
    #allocation4 [shape = 's32[1]{0}', space=sflag, size = 0x4, scoped, tag = 'scoped memory for tpu_custom_call.1']
    #allocation5 [shape = 'u8[2048]{0}', space=vmem, size = 0x800, scoped, tag = 'input window, operand 1, single buffered']
    #allocation6 [shape = 's32[1]{0}', space=sflag, size = 0x4, scoped, tag = 'scoped memory for tpu_custom_call.1']
    #allocation7 [shape = 'u8[32768]{0}', space=vmem, size = 0x8000, scoped, tag = 'input window, operand 3, single buffered']
    #allocation8 [shape = 'u8[32768]{0}', space=vmem, size = 0x8000, scoped, tag = 'input window, operand 5, single buffered']
    #allocation9 [shape = 's32[1]{0}', space=sflag, size = 0x4, scoped, tag = 'scoped memory for tpu_custom_call.1']
    #allocation10 [shape = 'u8[4096]{0}', space=vmem, size = 0x1000, scoped, tag = 'output window, operand 0, single buffered']
    %12 = vsyncpa [#allocation3], 0
    %13 = vsyncpa [#allocation6], 0
    %14 = vsyncpa [#allocation9], 0
    %15 = vsyncpa [#allocation4], 0
    // Predicated region
    $region2: #{tpu_custom_call.1} parent=1 // pred_check
      _
    $region3: #{tpu_custom_call.1} parent=1 // pred_check_branch
      %17 = sbr.rel (0) target = $region5
    $region4: #{tpu_custom_call.1} parent=1 // pred_region
      %19 = vsyncadd [#allocation3], 0
      %s21 = sshll.u32 %s0, 4
      %s22 = int_to_ptr.hbm [resolvable:$true] %s21
      %s23 = sshll.u32 [#allocation2], 4
      %s24 = int_to_ptr.vmem [resolvable:$true] %s23
      %26 = dma.hbm_to_vmem [thread:$0]  %s22, 64, %s24, [#allocation3]
    $region5: #{tpu_custom_call.1} parent=1 // pred_fallthru
      _
    // Predicated region
    $region6: #{tpu_custom_call.1} parent=1 // pred_check
      _
    $region7: #{tpu_custom_call.1} parent=1 // pred_check_branch
      %28 = sbr.rel (0) target = $region9
    $region8: #{tpu_custom_call.1} parent=1 // pred_region
      %30 = vsyncadd [#allocation6], 0
      %s32 = sshll.u32 %s1, 4
      %s33 = int_to_ptr.hbm [resolvable:$true] %s32
      %s34 = sshll.u32 [#allocation5], 4
      %s35 = int_to_ptr.vmem [resolvable:$true] %s34
      %37 = dma.hbm_to_vmem [thread:$0]  %s33, 64, %s35, [#allocation6]
    $region9: #{tpu_custom_call.1} parent=1 // pred_fallthru
      _
    // Predicated region
    $region10: #{tpu_custom_call.1} parent=1 // pred_check
      _
    $region11: #{tpu_custom_call.1} parent=1 // pred_check_branch
      %39 = sbr.rel (0) target = $region13
    $region12: #{tpu_custom_call.1} parent=1 // pred_region
      _
    $region13: #{tpu_custom_call.1} parent=1 // pred_fallthru
      _
    // Predicated region
    $region14: #{tpu_custom_call.1} parent=1 // pred_check
      _
    $region15: #{tpu_custom_call.1} parent=1 // pred_check_branch
      %41 = sbr.rel (0) target = $region17
    $region16: #{tpu_custom_call.1} parent=1 // pred_region
      %43 = vsyncadd [#allocation6], 0
      %s44 = sshll.u32 %s3, 4
      %s45 = int_to_ptr.hbm [resolvable:$true] %s44
      %s46 = sshll.u32 [#allocation7], 4
      %s47 = int_to_ptr.vmem [resolvable:$true] %s46
      %52 = dma.hbm_to_vmem [thread:$0]  %s45, 1024, %s47, [#allocation6], 64, 64, 4
    $region17: #{tpu_custom_call.1} parent=1 // pred_fallthru
      _
    // Predicated region
    $region18: #{tpu_custom_call.1} parent=1 // pred_check
      _
    $region19: #{tpu_custom_call.1} parent=1 // pred_check_branch
      %54 = sbr.rel (0) target = $region21
    $region20: #{tpu_custom_call.1} parent=1 // pred_region
      _
    $region21: #{tpu_custom_call.1} parent=1 // pred_fallthru
      _
    // Predicated region
    $region22: #{tpu_custom_call.1} parent=1 // pred_check
      _
    $region23: #{tpu_custom_call.1} parent=1 // pred_check_branch
      %56 = sbr.rel (0) target = $region25
    $region24: #{tpu_custom_call.1} parent=1 // pred_region
      %58 = vsyncadd [#allocation9], 0
      %s59 = sshll.u32 %s5, 4
      %s60 = int_to_ptr.hbm [resolvable:$true] %s59
      %s61 = sshll.u32 [#allocation8], 4
      %s62 = int_to_ptr.vmem [resolvable:$true] %s61
      %67 = dma.hbm_to_vmem [thread:$0]  %s60, 1024, %s62, [#allocation9], 64, 64, 4
    $region25: #{tpu_custom_call.1} parent=1 // pred_fallthru
      _
    // Predicated region
    $region26: #{tpu_custom_call.1} parent=1 // pred_check
      _
    $region27: #{tpu_custom_call.1} parent=1 // pred_check_branch
      %69 = sbr.rel (0) target = $region29
    $region28: #{tpu_custom_call.1} parent=1 // pred_region
      _
    $region29: #{tpu_custom_call.1} parent=1 // pred_fallthru
      _
    // Predicated region
    $region30: #{tpu_custom_call.1} parent=1 // pred_check
      _
    $region31: #{tpu_custom_call.1} parent=1 // pred_check_branch
      %71 = sbr.rel (0) target = $region33
    $region32: #{tpu_custom_call.1} parent=1 // pred_region
      %73 = dma.done [#allocation3], 64
    $region33: #{tpu_custom_call.1} parent=1 // pred_fallthru
      _
    // Predicated region
    $region34: #{tpu_custom_call.1} parent=1 // pred_check
      _
    $region35: #{tpu_custom_call.1} parent=1 // pred_check_branch
      %75 = sbr.rel (0) target = $region37
    $region36: #{tpu_custom_call.1} parent=1 // pred_region
      %77 = dma.done [#allocation6], 64
    $region37: #{tpu_custom_call.1} parent=1 // pred_fallthru
      _
    // Predicated region
    $region38: #{tpu_custom_call.1} parent=1 // pred_check
      _
    $region39: #{tpu_custom_call.1} parent=1 // pred_check_branch
      %79 = sbr.rel (0) target = $region41
    $region40: #{tpu_custom_call.1} parent=1 // pred_region
      %81 = dma.done [#allocation6], 1024
    $region41: #{tpu_custom_call.1} parent=1 // pred_fallthru
      _
    // Predicated region
    $region42: #{tpu_custom_call.1} parent=1 // pred_check
      _
    $region43: #{tpu_custom_call.1} parent=1 // pred_check_branch
      %83 = sbr.rel (0) target = $region45
    $region44: #{tpu_custom_call.1} parent=1 // pred_region
      %85 = dma.done [#allocation9], 1024
    $region45: #{tpu_custom_call.1} parent=1 // pred_fallthru
      _
    %v87 = vld [vmem:[#allocation2] sm:$0xf]
    %v88 = vld [vmem:[#allocation5] sm:$0xf]
    %v89 = vld [vmem:[%s2] sm:$0x1]
    %v91 = vperm.slane %v89, 0
    %vm93 = vcmask 64512
    %v95 = vsel %vm93, %v87, 0
    %vm97 = vcmask 1043456
    %v99 = vsel %vm97, %v88, 0
    %101 = vmatpush.bf16.msra.mxu0 0
    %102 = vmatpush.bf16.msra.mxu0 0
    %103 = vmatpush.bf16.msra.mxu0 0
    %104 = vmatpush.bf16.msra.mxu0 0
    %105 = vmatpush.bf16.msra.mxu0 0
    %106 = vmatpush.bf16.msra.mxu0 0
    %107 = vmatpush.bf16.msra.mxu0 0
    %108 = vmatpush.bf16.msra.mxu0 %v99
    %109 = vmatmul.bf16.gmra.mxu0 %v95
    %v110 = vpop.f32.mrf.mxu0
    %v111 = vadd.f32 %v91, %v110
    %v112 = vpop.f32.mrf.mxu0
    %113 = vdwg.mxu0
    %vm114 = vcmp.ge.f32.partialorder %v111, 0.0
    %v115 = vmul.f32 %v111, 0.2
    %v116 = vsel %vm114, %v111, %v115
    %v117 = vpack.c.bf16 %v116, %v116
    %v118 = vld [vmem:[#allocation7] sm:$0xf]
    %v119 = vld [vmem:[#allocation7 + $0x4] sm:$0xf]
    %v120 = vld [vmem:[#allocation7 + $0x8] sm:$0xf]
    %v121 = vld [vmem:[#allocation7 + $0xc] sm:$0xf]
    %v122 = vld [vmem:[#allocation7 + $0x10] sm:$0xf]
    %v123 = vld [vmem:[#allocation7 + $0x14] sm:$0xf]
    %v124 = vld [vmem:[#allocation7 + $0x18] sm:$0xf]
    %v125 = vld [vmem:[#allocation7 + $0x1c] sm:$0xf]
    %v126 = vld [vmem:[#allocation7 + $0x20] sm:$0xf]
    %v127 = vld [vmem:[#allocation7 + $0x24] sm:$0xf]
    %v128 = vld [vmem:[#allocation7 + $0x28] sm:$0xf]
    %v129 = vld [vmem:[#allocation7 + $0x2c] sm:$0xf]
    %v130 = vld [vmem:[#allocation7 + $0x30] sm:$0xf]
    %v131 = vld [vmem:[#allocation7 + $0x34] sm:$0xf]
    %v132 = vld [vmem:[#allocation7 + $0x38] sm:$0xf]
    %v133 = vld [vmem:[#allocation7 + $0x3c] sm:$0xf]
    %v134 = vld [vmem:[%s4] sm:$0x1]
    %v136 = vperm.slane %v134, 0
    %v154 = vunpack.c.l.b16 %v118
    %v155 = vunpack.c.l.b16 %v119
    %v156 = vunpack.c.l.b16 %v120
    %v157 = vunpack.c.l.b16 %v121
    %v158 = vunpack.c.l.b16 %v122
    %v159 = vunpack.c.l.b16 %v123
    %v160 = vunpack.c.l.b16 %v124
    %v161 = vunpack.c.l.b16 %v125
    %v162 = vunpack.c.l.b16 %v126
    %v163 = vunpack.c.l.b16 %v127
    %v164 = vunpack.c.l.b16 %v128
    %v165 = vunpack.c.l.b16 %v129
    %v166 = vunpack.c.l.b16 %v130
    %v167 = vunpack.c.l.b16 %v131
    %v168 = vunpack.c.l.b16 %v132
    %v169 = vunpack.c.l.b16 %v133
    %v170 = vpack.c.b16 %v155, %v154
    %v171 = vpack.c.b16 %v157, %v156
    %v172 = vpack.c.b16 %v159, %v158
    %v173 = vpack.c.b16 %v161, %v160
    %v174 = vpack.c.b16 %v163, %v162
    %v175 = vpack.c.b16 %v165, %v164
    %v176 = vpack.c.b16 %v167, %v166
    %v177 = vpack.c.b16 %v169, %v168
    %186 = vmatpush.bf16.msra.mxu0 %v177
    %187 = vmatpush.bf16.msra.mxu0 %v176
    %188 = vmatpush.bf16.msra.mxu0 %v175
    %189 = vmatpush.bf16.msra.mxu0 %v174
    %190 = vmatpush.bf16.msra.mxu0 %v173
    %191 = vmatpush.bf16.msra.mxu0 %v172
    %192 = vmatpush.bf16.msra.mxu0 %v171
    %193 = vmatpush.bf16.msra.mxu0 %v170
    %194 = vmatmul.bf16.gmra.mxu0 %v117
    %v195 = vpop.f32.mrf.mxu0
    %v196 = vadd.f32 %v136, %v195
    %v197 = vpop.f32.mrf.mxu0
    %198 = vdwg.mxu0
    %vm199 = vcmp.ge.f32.partialorder %v196, 0.0
    %v200 = vmul.f32 %v196, 0.2
    %v201 = vsel %vm199, %v196, %v200
    %v202 = vpack.c.bf16 %v201, %v201
    %v203 = vld [vmem:[#allocation8] sm:$0xf]
    %v204 = vld [vmem:[#allocation8 + $0x4] sm:$0xf]
    %v205 = vld [vmem:[#allocation8 + $0x8] sm:$0xf]
    %v206 = vld [vmem:[#allocation8 + $0xc] sm:$0xf]
    %v207 = vld [vmem:[#allocation8 + $0x10] sm:$0xf]
    %v208 = vld [vmem:[#allocation8 + $0x14] sm:$0xf]
    %v209 = vld [vmem:[#allocation8 + $0x18] sm:$0xf]
    %v210 = vld [vmem:[#allocation8 + $0x1c] sm:$0xf]
    %v211 = vld [vmem:[#allocation8 + $0x20] sm:$0xf]
    %v212 = vld [vmem:[#allocation8 + $0x24] sm:$0xf]
    %v213 = vld [vmem:[#allocation8 + $0x28] sm:$0xf]
    %v214 = vld [vmem:[#allocation8 + $0x2c] sm:$0xf]
    %v215 = vld [vmem:[#allocation8 + $0x30] sm:$0xf]
    %v216 = vld [vmem:[#allocation8 + $0x34] sm:$0xf]
    %v217 = vld [vmem:[#allocation8 + $0x38] sm:$0xf]
    %v218 = vld [vmem:[#allocation8 + $0x3c] sm:$0xf]
    %v219 = vld [vmem:[%s6] sm:$0x1]
    %v221 = vperm.slane %v219, 0
    %v239 = vunpack.c.l.b16 %v203
    %v240 = vunpack.c.l.b16 %v204
    %v241 = vunpack.c.l.b16 %v205
    %v242 = vunpack.c.l.b16 %v206
    %v243 = vunpack.c.l.b16 %v207
    %v244 = vunpack.c.l.b16 %v208
    %v245 = vunpack.c.l.b16 %v209
    %v246 = vunpack.c.l.b16 %v210
    %v247 = vunpack.c.l.b16 %v211
    %v248 = vunpack.c.l.b16 %v212
    %v249 = vunpack.c.l.b16 %v213
    %v250 = vunpack.c.l.b16 %v214
    %v251 = vunpack.c.l.b16 %v215
    %v252 = vunpack.c.l.b16 %v216
    %v253 = vunpack.c.l.b16 %v217
    %v254 = vunpack.c.l.b16 %v218
    %v255 = vpack.c.b16 %v240, %v239
    %v256 = vpack.c.b16 %v242, %v241
    %v257 = vpack.c.b16 %v244, %v243
    %v258 = vpack.c.b16 %v246, %v245
    %v259 = vpack.c.b16 %v248, %v247
    %v260 = vpack.c.b16 %v250, %v249
    %v261 = vpack.c.b16 %v252, %v251
    %v262 = vpack.c.b16 %v254, %v253
    %271 = vmatpush.bf16.msra.mxu0 %v262
    %272 = vmatpush.bf16.msra.mxu0 %v261
    %273 = vmatpush.bf16.msra.mxu0 %v260
    %274 = vmatpush.bf16.msra.mxu0 %v259
    %275 = vmatpush.bf16.msra.mxu0 %v258
    %276 = vmatpush.bf16.msra.mxu0 %v257
    %277 = vmatpush.bf16.msra.mxu0 %v256
    %278 = vmatpush.bf16.msra.mxu0 %v255
    %279 = vmatmul.bf16.gmra.mxu0 %v202
    %v280 = vpop.f32.mrf.mxu0
    %v281 = vadd.f32 %v221, %v280
    %v282 = vpop.f32.mrf.mxu0
    %283 = vdwg.mxu0
    %284 = vst [vmem:[#allocation10] sm:$0xff] %v281
    // Predicated region
    $region46: #{tpu_custom_call.1} parent=1 // pred_check
      _
    $region47: #{tpu_custom_call.1} parent=1 // pred_check_branch
      %286 = sbr.rel (0) target = $region49
    $region48: #{tpu_custom_call.1} parent=1 // pred_region
      %288 = vsyncadd [#allocation4], 0
      %s290 = sshll.u32 [#allocation10], 4
      %s291 = int_to_ptr.vmem [resolvable:$true] %s290
      %s292 = sshll.u32 %s7, 4
      %s293 = int_to_ptr.hbm [resolvable:$true] %s292
      %295 = dma.vmem_to_hbm [thread:$0]  %s291, 128, %s293, [#allocation4]
    $region49: #{tpu_custom_call.1} parent=1 // pred_fallthru
      _
    // Predicated region
    $region50: #{tpu_custom_call.1} parent=1 // pred_check
      _
    $region51: #{tpu_custom_call.1} parent=1 // pred_check_branch
      %297 = sbr.rel (0) target = $region53
    $region52: #{tpu_custom_call.1} parent=1 // pred_region
      %299 = dma.done [#allocation4], 128
    $region53: #{tpu_custom_call.1} parent=1 // pred_fallthru
      _
    %300 = vsyncpa [#allocation3], 1
    %301 = vsyncpa [#allocation6], 1
    %302 = vsyncpa [#allocation9], 1
    %303 = vsyncpa [#allocation4], 1

</llo_original>
